<compile_context>
chip_gen: v7x
topology: tpu7x:2x2x1
jax: 0.10.0
libtpu: 0.0.40
codegen_flags: <defaults>
</compile_context>

<pallas_src>
import jax
import jax.numpy as jnp
from jax import lax
from jax.experimental import pallas as pl
from jax.experimental.pallas import tpu as pltpu


def _bilstm_recurrence_kernel(xpf_ref, xpb_ref, whhf_ref, whhb_ref,
                              outf_ref, outb_ref,
                              hf, cf, hb, cb):
    """Bidirectional LSTM recurrence for one batch block.

    xpf_ref / xpb_ref : (T, Bblk, 4H) precomputed input projections (+biases)
                        for the forward / backward direction.
    whhf_ref/whhb_ref : (H, 4H) recurrent weights, pre-transposed so each step
                        is  h @ W_hh^T  without an in-kernel transpose.
    outf_ref/outb_ref : (T, Bblk, H) per-direction hidden-state outputs.
    hf/cf/hb/cb       : (Bblk, H) f32 VMEM scratch — recurrent state.
    """
    T = xpf_ref.shape[0]
    H = hf.shape[1]

    hf[...] = jnp.zeros_like(hf)
    cf[...] = jnp.zeros_like(cf)
    hb[...] = jnp.zeros_like(hb)
    cb[...] = jnp.zeros_like(cb)

    # Hoist the (small) recurrent weights into registers once.
    w_f = whhf_ref[...]
    w_b = whhb_ref[...]

    def step(t, carry):
        # ---------- forward direction, time step t ----------
        g = xpf_ref[t] + jnp.dot(hf[...], w_f, preferred_element_type=jnp.float32)
        i_g = jax.nn.sigmoid(g[:, 0 * H:1 * H])
        f_g = jax.nn.sigmoid(g[:, 1 * H:2 * H])
        c_g = jnp.tanh(g[:, 2 * H:3 * H])
        o_g = jax.nn.sigmoid(g[:, 3 * H:4 * H])
        c_new = f_g * cf[...] + i_g * c_g
        h_new = o_g * jnp.tanh(c_new)
        cf[...] = c_new
        hf[...] = h_new
        outf_ref[t] = h_new

        # ---------- backward direction, time step T-1-t ----------
        tb = T - 1 - t
        gb = xpb_ref[tb] + jnp.dot(hb[...], w_b, preferred_element_type=jnp.float32)
        i_b = jax.nn.sigmoid(gb[:, 0 * H:1 * H])
        f_b = jax.nn.sigmoid(gb[:, 1 * H:2 * H])
        c_bg = jnp.tanh(gb[:, 2 * H:3 * H])
        o_b = jax.nn.sigmoid(gb[:, 3 * H:4 * H])
        cb_new = f_b * cb[...] + i_b * c_bg
        hb_new = o_b * jnp.tanh(cb_new)
        cb[...] = cb_new
        hb[...] = hb_new
        outb_ref[tb] = hb_new
        return carry

    lax.fori_loop(0, T, step, 0)


def _pick_batch_block(batch):
    """Batch-block size: fill the 8-sublane axis, amortize per-step overhead."""
    if batch % 8 != 0:
        return batch                    # small / ragged batch: single block
    for cand in (64, 32, 16, 8):
        if batch % cand == 0:
            return cand
    return batch


def _bilstm_recurrence(xpf, xpb, whh_f_t, whh_b_t, hidden_dim):
    """xpf/xpb: (T, B, 4H) f32, whh_*_t: (H, 4H) f32 -> (out_f, out_b) each (T, B, H)."""
    T, B, G = xpf.shape
    H = hidden_dim
    assert G == 4 * H
    b_blk = _pick_batch_block(B)
    grid = (B // b_blk,)

    grid_spec = pltpu.PrefetchScalarGridSpec(
        num_scalar_prefetch=0,
        grid=grid,
        in_specs=[
            pl.BlockSpec((T, b_blk, G), lambda b: (0, b, 0)),   # x-proj fwd
            pl.BlockSpec((T, b_blk, G), lambda b: (0, b, 0)),   # x-proj bwd
            pl.BlockSpec((H, G), lambda b: (0, 0)),             # W_hh fwd (shared)
            pl.BlockSpec((H, G), lambda b: (0, 0)),             # W_hh bwd (shared)
        ],
        out_specs=[
            pl.BlockSpec((T, b_blk, H), lambda b: (0, b, 0)),   # h fwd
            pl.BlockSpec((T, b_blk, H), lambda b: (0, b, 0)),   # h bwd
        ],
        scratch_shapes=[
            pltpu.VMEM((b_blk, H), jnp.float32),   # h forward
            pltpu.VMEM((b_blk, H), jnp.float32),   # c forward
            pltpu.VMEM((b_blk, H), jnp.float32),   # h backward
            pltpu.VMEM((b_blk, H), jnp.float32),   # c backward
        ],
    )

    return pl.pallas_call(
        _bilstm_recurrence_kernel,
        out_shape=(jax.ShapeDtypeStruct((T, B, H), jnp.float32),
                   jax.ShapeDtypeStruct((T, B, H), jnp.float32)),
        grid_spec=grid_spec,
        compiler_params=pltpu.CompilerParams(
            dimension_semantics=("parallel",),
            vmem_limit_bytes=32 * 1024 * 1024),
    )(xpf, xpb, whh_f_t, whh_b_t)


def stacked_brnn_forward(x, params, hidden_dim):
    """x: (B, T, D_in) f32.  params: list (one per layer) of dicts with
    PyTorch-layout bidirectional LSTM weights:
        w_ih_f (4H, D_i), w_hh_f (4H, H), b_ih_f (4H,), b_hh_f (4H,)
        and the *_b counterparts for the reverse direction.
    Returns (B, T, num_layers * 2H) — matches StackedBRNN.forward output."""
    H = hidden_dim
    hi = jax.lax.Precision.HIGHEST
    layer_in = x
    layer_outs = []
    for p in params:
        # Hoisted time-parallel input projections (one GEMM per direction,
        # both biases folded in), then time-major layout for the kernel.
        xpf = jnp.einsum('btd,gd->btg', layer_in, p['w_ih_f'], precision=hi)
        xpf = xpf + p['b_ih_f'] + p['b_hh_f']
        xpb = jnp.einsum('btd,gd->btg', layer_in, p['w_ih_b'], precision=hi)
        xpb = xpb + p['b_ih_b'] + p['b_hh_b']
        xpf = jnp.transpose(xpf, (1, 0, 2)).astype(jnp.float32)    # (T, B, 4H)
        xpb = jnp.transpose(xpb, (1, 0, 2)).astype(jnp.float32)

        out_f, out_b = _bilstm_recurrence(
            xpf, xpb,
            jnp.transpose(p['w_hh_f']).astype(jnp.float32),        # (H, 4H)
            jnp.transpose(p['w_hh_b']).astype(jnp.float32),
            H)

        layer_out = jnp.concatenate([out_f, out_b], axis=-1)       # (T, B, 2H)
        layer_out = jnp.transpose(layer_out, (1, 0, 2))            # (B, T, 2H)
        layer_outs.append(layer_out)
        layer_in = layer_out

    out = jnp.concatenate(layer_outs, axis=2)                      # (B, T, L*2H)
    # TODO(synk): F.dropout omitted — the per-layer dropout in the original
    # forward is dead code (its result is immediately overwritten) and the
    # final dropout is stochastic; treated as identity for deterministic
    # inference.
    return out


# ------------------------- pure-JAX reference -------------------------------

def _lstm_direction_ref(x, w_ih, w_hh, b_ih, b_hh, reverse):
    B, T, _ = x.shape
    H = w_hh.shape[1]
    hi = jax.lax.Precision.HIGHEST
    h = jnp.zeros((B, H), jnp.float32)
    c = jnp.zeros((B, H), jnp.float32)
    outs = [None] * T
    order = range(T - 1, -1, -1) if reverse else range(T)
    for t in order:
        g = (jnp.dot(x[:, t], w_ih.T, precision=hi) + b_ih
             + jnp.dot(h, w_hh.T, precision=hi) + b_hh)
        i = jax.nn.sigmoid(g[:, 0:H])
        f = jax.nn.sigmoid(g[:, H:2 * H])
        gg = jnp.tanh(g[:, 2 * H:3 * H])
        o = jax.nn.sigmoid(g[:, 3 * H:4 * H])
        c = f * c + i * gg
        h = o * jnp.tanh(c)
        outs[t] = h
    return jnp.stack(outs, axis=1)                                  # (B, T, H)


def stacked_brnn_ref(x, params, hidden_dim):
    layer_in = x
    outs = []
    for p in params:
        of = _lstm_direction_ref(layer_in, p['w_ih_f'], p['w_hh_f'],
                                 p['b_ih_f'], p['b_hh_f'], reverse=False)
        ob = _lstm_direction_ref(layer_in, p['w_ih_b'], p['w_hh_b'],
                                 p['b_ih_b'], p['b_hh_b'], reverse=True)
        lo = jnp.concatenate([of, ob], axis=-1)
        outs.append(lo)
        layer_in = lo
    return jnp.concatenate(outs, axis=2)


if __name__ == "__main__":
    B, T = 2, 8
    INPUT_DIM, HIDDEN_DIM, NUM_LAYERS = 16, 32, 2

    key = jax.random.PRNGKey(0)
    key, kx = jax.random.split(key)
    x = jax.random.normal(kx, (B, T, INPUT_DIM), dtype=jnp.float32)

    # Deterministic PyTorch-style LSTM parameters per layer.
    bound = 1.0 / (HIDDEN_DIM ** 0.5)
    params = []
    for layer in range(NUM_LAYERS):
        d_in = INPUT_DIM if layer == 0 else 2 * HIDDEN_DIM
        layer_p = {}
        for name, shape in [('w_ih_f', (4 * HIDDEN_DIM, d_in)),
                            ('w_hh_f', (4 * HIDDEN_DIM, HIDDEN_DIM)),
                            ('b_ih_f', (4 * HIDDEN_DIM,)),
                            ('b_hh_f', (4 * HIDDEN_DIM,)),
                            ('w_ih_b', (4 * HIDDEN_DIM, d_in)),
                            ('w_hh_b', (4 * HIDDEN_DIM, HIDDEN_DIM)),
                            ('b_ih_b', (4 * HIDDEN_DIM,)),
                            ('b_hh_b', (4 * HIDDEN_DIM,))]:
            key, k = jax.random.split(key)
            layer_p[name] = jax.random.uniform(
                k, shape, minval=-bound, maxval=bound, dtype=jnp.float32)
        params.append(layer_p)

    out = stacked_brnn_forward(x, params, HIDDEN_DIM)
    out = jax.block_until_ready(out)

    ref = stacked_brnn_ref(x, params, HIDDEN_DIM)
    assert out.shape == (B, T, NUM_LAYERS * 2 * HIDDEN_DIM)
    max_err = float(jnp.max(jnp.abs(out - ref)))
    assert bool(jnp.allclose(out, ref, atol=2e-3, rtol=2e-3)), max_err

    print("KERNEL_OK")
</pallas_src>

<mosaic_0001>
module attributes {stable_mosaic.version = 11 : i64} {
  func.func @_bilstm_recurrence_kernel(%arg0: i32, %arg1: memref<8x2x128xf32, #tpu.memory_space<vmem>>, %arg2: memref<8x2x128xf32, #tpu.memory_space<vmem>>, %arg3: memref<32x128xf32, #tpu.memory_space<vmem>>, %arg4: memref<32x128xf32, #tpu.memory_space<vmem>>, %arg5: memref<8x2x32xf32, #tpu.memory_space<vmem>>, %arg6: memref<8x2x32xf32, #tpu.memory_space<vmem>>, %arg7: memref<2x32xf32, #tpu.memory_space<vmem>>, %arg8: memref<2x32xf32, #tpu.memory_space<vmem>>, %arg9: memref<2x32xf32, #tpu.memory_space<vmem>>, %arg10: memref<2x32xf32, #tpu.memory_space<vmem>>) attributes {dimension_semantics = [#tpu.dimension_semantics<parallel>], iteration_bounds = array<i64: 1>, scalar_prefetch = 0 : i64, scratch_operands = 4 : i64, tpu.core_type = #tpu.core_type<tc>, window_params = [{transform_indices = @transform_0, window_bounds = array<i64: 8, 2, 128>}, {transform_indices = @transform_1, window_bounds = array<i64: 8, 2, 128>}, {pipeline_mode = #tpu.pipeline_mode<synchronous>, transform_indices = @transform_2, window_bounds = array<i64: 32, 128>}, {pipeline_mode = #tpu.pipeline_mode<synchronous>, transform_indices = @transform_3, window_bounds = array<i64: 32, 128>}, {transform_indices = @transform_4, window_bounds = array<i64: 8, 2, 32>}, {transform_indices = @transform_5, window_bounds = array<i64: 8, 2, 32>}]} {
    %cst = arith.constant 0.000000e+00 : f32
    %0 = vector.broadcast %cst : f32 to vector<2x32xf32>
    %c0 = arith.constant 0 : index
    %c0_0 = arith.constant 0 : index
    %1 = vector.load %arg7[%c0, %c0_0] : memref<2x32xf32, #tpu.memory_space<vmem>>, vector<2x32xf32>
    tpu.vector_store %arg7[%c0, %c0_0], %0 {strides = array<i32>} : memref<2x32xf32, #tpu.memory_space<vmem>>, vector<2x32xf32>,
    %cst_1 = arith.constant 0.000000e+00 : f32
    %2 = vector.broadcast %cst_1 : f32 to vector<2x32xf32>
    %c0_2 = arith.constant 0 : index
    %c0_3 = arith.constant 0 : index
    %3 = vector.load %arg8[%c0_2, %c0_3] : memref<2x32xf32, #tpu.memory_space<vmem>>, vector<2x32xf32>
    tpu.vector_store %arg8[%c0_2, %c0_3], %2 {strides = array<i32>} : memref<2x32xf32, #tpu.memory_space<vmem>>, vector<2x32xf32>,
    %cst_4 = arith.constant 0.000000e+00 : f32
    %4 = vector.broadcast %cst_4 : f32 to vector<2x32xf32>
    %c0_5 = arith.constant 0 : index
    %c0_6 = arith.constant 0 : index
    %5 = vector.load %arg9[%c0_5, %c0_6] : memref<2x32xf32, #tpu.memory_space<vmem>>, vector<2x32xf32>
    tpu.vector_store %arg9[%c0_5, %c0_6], %4 {strides = array<i32>} : memref<2x32xf32, #tpu.memory_space<vmem>>, vector<2x32xf32>,
    %cst_7 = arith.constant 0.000000e+00 : f32
    %6 = vector.broadcast %cst_7 : f32 to vector<2x32xf32>
    %c0_8 = arith.constant 0 : index
    %c0_9 = arith.constant 0 : index
    %7 = vector.load %arg10[%c0_8, %c0_9] : memref<2x32xf32, #tpu.memory_space<vmem>>, vector<2x32xf32>
    tpu.vector_store %arg10[%c0_8, %c0_9], %6 {strides = array<i32>} : memref<2x32xf32, #tpu.memory_space<vmem>>, vector<2x32xf32>,
    %c0_10 = arith.constant 0 : index
    %c0_11 = arith.constant 0 : index
    %8 = vector.load %arg3[%c0_10, %c0_11] : memref<32x128xf32, #tpu.memory_space<vmem>>, vector<32x128xf32>
    %c0_12 = arith.constant 0 : index
    %c0_13 = arith.constant 0 : index
    %9 = vector.load %arg4[%c0_12, %c0_13] : memref<32x128xf32, #tpu.memory_space<vmem>>, vector<32x128xf32>
    %c0_i32 = arith.constant 0 : i32
    %c8_i32 = arith.constant 8 : i32
    %10 = arith.addi %c0_i32, %c8_i32 : i32
    %c1_i32 = arith.constant 1 : i32
    scf.for %arg11 = %c0_i32 to %10 step %c1_i32  : i32 {
      %11 = arith.index_cast %arg11 : i32 to index
      %c0_15 = arith.constant 0 : index
      %c0_16 = arith.constant 0 : index
      %12 = vector.load %arg1[%11, %c0_15, %c0_16] : memref<8x2x128xf32, #tpu.memory_space<vmem>>, vector<1x2x128xf32>
      %13 = vector.shape_cast %12 : vector<1x2x128xf32> to vector<2x128xf32>
      %c0_17 = arith.constant 0 : index
      %c0_18 = arith.constant 0 : index
      %14 = vector.load %arg7[%c0_17, %c0_18] : memref<2x32xf32, #tpu.memory_space<vmem>>, vector<2x32xf32>
      %cst_19 = arith.constant dense<0.000000e+00> : vector<2x128xf32>
      %15 = tpu.matmul %14, %8, %cst_19 {dimension_numbers = #tpu.dot_dimension_numbers<[1], [0], [0], [1], [0, 0, 1, 1], [], []>} : vector<2x32xf32>, vector<32x128xf32>, vector<2x128xf32> -> vector<2x128xf32>
      %16 = arith.addf %13, %15 : vector<2x128xf32>
      %17 = vector.extract_strided_slice %16 {offsets = [0, 0], sizes = [2, 32], strides = [1, 1]} : vector<2x128xf32> to vector<2x32xf32>
      %18 = arith.negf %17 : vector<2x32xf32>
      %19 = math.exp %18 : vector<2x32xf32>
      %cst_20 = arith.constant 1.000000e+00 : f32
      %20 = vector.broadcast %cst_20 : f32 to vector<2x32xf32>
      %21 = arith.addf %20, %19 : vector<2x32xf32>
      %22 = arith.divf %20, %21 : vector<2x32xf32>
      %23 = vector.extract_strided_slice %16 {offsets = [0, 32], sizes = [2, 32], strides = [1, 1]} : vector<2x128xf32> to vector<2x32xf32>
      %24 = arith.negf %23 : vector<2x32xf32>
      %25 = math.exp %24 : vector<2x32xf32>
      %cst_21 = arith.constant 1.000000e+00 : f32
      %26 = vector.broadcast %cst_21 : f32 to vector<2x32xf32>
      %27 = arith.addf %26, %25 : vector<2x32xf32>
      %28 = arith.divf %26, %27 : vector<2x32xf32>
      %29 = vector.extract_strided_slice %16 {offsets = [0, 64], sizes = [2, 32], strides = [1, 1]} : vector<2x128xf32> to vector<2x32xf32>
      %30 = math.tanh %29 : vector<2x32xf32>
      %31 = vector.extract_strided_slice %16 {offsets = [0, 96], sizes = [2, 32], strides = [1, 1]} : vector<2x128xf32> to vector<2x32xf32>
      %32 = arith.negf %31 : vector<2x32xf32>
      %33 = math.exp %32 : vector<2x32xf32>
      %cst_22 = arith.constant 1.000000e+00 : f32
      %34 = vector.broadcast %cst_22 : f32 to vector<2x32xf32>
      %35 = arith.addf %34, %33 : vector<2x32xf32>
      %36 = arith.divf %34, %35 : vector<2x32xf32>
      %c0_23 = arith.constant 0 : index
      %c0_24 = arith.constant 0 : index
      %37 = vector.load %arg8[%c0_23, %c0_24] : memref<2x32xf32, #tpu.memory_space<vmem>>, vector<2x32xf32>
      %38 = arith.mulf %28, %37 : vector<2x32xf32>
      %39 = arith.mulf %22, %30 : vector<2x32xf32>
      %40 = arith.addf %38, %39 : vector<2x32xf32>
      %41 = math.tanh %40 : vector<2x32xf32>
      %42 = arith.mulf %36, %41 : vector<2x32xf32>
      %c0_25 = arith.constant 0 : index
      %c0_26 = arith.constant 0 : index
      %43 = vector.load %arg8[%c0_25, %c0_26] : memref<2x32xf32, #tpu.memory_space<vmem>>, vector<2x32xf32>
      tpu.vector_store %arg8[%c0_25, %c0_26], %40 {strides = array<i32>} : memref<2x32xf32, #tpu.memory_space<vmem>>, vector<2x32xf32>,
      %c0_27 = arith.constant 0 : index
      %c0_28 = arith.constant 0 : index
      %44 = vector.load %arg7[%c0_27, %c0_28] : memref<2x32xf32, #tpu.memory_space<vmem>>, vector<2x32xf32>
      tpu.vector_store %arg7[%c0_27, %c0_28], %42 {strides = array<i32>} : memref<2x32xf32, #tpu.memory_space<vmem>>, vector<2x32xf32>,
      %45 = arith.index_cast %arg11 : i32 to index
      %c0_29 = arith.constant 0 : index
      %c0_30 = arith.constant 0 : index
      %46 = vector.load %arg5[%45, %c0_29, %c0_30] : memref<8x2x32xf32, #tpu.memory_space<vmem>>, vector<1x2x32xf32>
      %47 = vector.shape_cast %46 : vector<1x2x32xf32> to vector<2x32xf32>
      %48 = vector.shape_cast %42 : vector<2x32xf32> to vector<1x2x32xf32>
      tpu.vector_store %arg5[%45, %c0_29, %c0_30], %48 {strides = array<i32>} : memref<8x2x32xf32, #tpu.memory_space<vmem>>, vector<1x2x32xf32>,
      %c7_i32 = arith.constant 7 : i32
      %49 = arith.subi %c7_i32, %arg11 : i32
      %50 = arith.index_cast %49 : i32 to index
      %c0_31 = arith.constant 0 : index
      %c0_32 = arith.constant 0 : index
      %51 = vector.load %arg2[%50, %c0_31, %c0_32] : memref<8x2x128xf32, #tpu.memory_space<vmem>>, vector<1x2x128xf32>
      %52 = vector.shape_cast %51 : vector<1x2x128xf32> to vector<2x128xf32>
      %c0_33 = arith.constant 0 : index
      %c0_34 = arith.constant 0 : index
      %53 = vector.load %arg9[%c0_33, %c0_34] : memref<2x32xf32, #tpu.memory_space<vmem>>, vector<2x32xf32>
      %cst_35 = arith.constant dense<0.000000e+00> : vector<2x128xf32>
      %54 = tpu.matmul %53, %9, %cst_35 {dimension_numbers = #tpu.dot_dimension_numbers<[1], [0], [0], [1], [0, 0, 1, 1], [], []>} : vector<2x32xf32>, vector<32x128xf32>, vector<2x128xf32> -> vector<2x128xf32>
      %55 = arith.addf %52, %54 : vector<2x128xf32>
      %56 = vector.extract_strided_slice %55 {offsets = [0, 0], sizes = [2, 32], strides = [1, 1]} : vector<2x128xf32> to vector<2x32xf32>
      %57 = arith.negf %56 : vector<2x32xf32>
      %58 = math.exp %57 : vector<2x32xf32>
      %cst_36 = arith.constant 1.000000e+00 : f32
      %59 = vector.broadcast %cst_36 : f32 to vector<2x32xf32>
      %60 = arith.addf %59, %58 : vector<2x32xf32>
      %61 = arith.divf %59, %60 : vector<2x32xf32>
      %62 = vector.extract_strided_slice %55 {offsets = [0, 32], sizes = [2, 32], strides = [1, 1]} : vector<2x128xf32> to vector<2x32xf32>
      %63 = arith.negf %62 : vector<2x32xf32>
      %64 = math.exp %63 : vector<2x32xf32>
      %cst_37 = arith.constant 1.000000e+00 : f32
      %65 = vector.broadcast %cst_37 : f32 to vector<2x32xf32>
      %66 = arith.addf %65, %64 : vector<2x32xf32>
      %67 = arith.divf %65, %66 : vector<2x32xf32>
      %68 = vector.extract_strided_slice %55 {offsets = [0, 64], sizes = [2, 32], strides = [1, 1]} : vector<2x128xf32> to vector<2x32xf32>
      %69 = math.tanh %68 : vector<2x32xf32>
      %70 = vector.extract_strided_slice %55 {offsets = [0, 96], sizes = [2, 32], strides = [1, 1]} : vector<2x128xf32> to vector<2x32xf32>
      %71 = arith.negf %70 : vector<2x32xf32>
      %72 = math.exp %71 : vector<2x32xf32>
      %cst_38 = arith.constant 1.000000e+00 : f32
      %73 = vector.broadcast %cst_38 : f32 to vector<2x32xf32>
      %74 = arith.addf %73, %72 : vector<2x32xf32>
      %75 = arith.divf %73, %74 : vector<2x32xf32>
      %c0_39 = arith.constant 0 : index
      %c0_40 = arith.constant 0 : index
      %76 = vector.load %arg10[%c0_39, %c0_40] : memref<2x32xf32, #tpu.memory_space<vmem>>, vector<2x32xf32>
      %77 = arith.mulf %67, %76 : vector<2x32xf32>
      %78 = arith.mulf %61, %69 : vector<2x32xf32>
      %79 = arith.addf %77, %78 : vector<2x32xf32>
      %80 = math.tanh %79 : vector<2x32xf32>
      %81 = arith.mulf %75, %80 : vector<2x32xf32>
      %c0_41 = arith.constant 0 : index
      %c0_42 = arith.constant 0 : index
      %82 = vector.load %arg10[%c0_41, %c0_42] : memref<2x32xf32, #tpu.memory_space<vmem>>, vector<2x32xf32>
      tpu.vector_store %arg10[%c0_41, %c0_42], %79 {strides = array<i32>} : memref<2x32xf32, #tpu.memory_space<vmem>>, vector<2x32xf32>,
      %c0_43 = arith.constant 0 : index
      %c0_44 = arith.constant 0 : index
      %83 = vector.load %arg9[%c0_43, %c0_44] : memref<2x32xf32, #tpu.memory_space<vmem>>, vector<2x32xf32>
      tpu.vector_store %arg9[%c0_43, %c0_44], %81 {strides = array<i32>} : memref<2x32xf32, #tpu.memory_space<vmem>>, vector<2x32xf32>,
      %84 = arith.index_cast %49 : i32 to index
      %c0_45 = arith.constant 0 : index
      %c0_46 = arith.constant 0 : index
      %85 = vector.load %arg6[%84, %c0_45, %c0_46] : memref<8x2x32xf32, #tpu.memory_space<vmem>>, vector<1x2x32xf32>
      %86 = vector.shape_cast %85 : vector<1x2x32xf32> to vector<2x32xf32>
      %87 = vector.shape_cast %81 : vector<2x32xf32> to vector<1x2x32xf32>
      tpu.vector_store %arg6[%84, %c0_45, %c0_46], %87 {strides = array<i32>} : memref<8x2x32xf32, #tpu.memory_space<vmem>>, vector<1x2x32xf32>,
    }
    %c8_i32_14 = arith.constant 8 : i32
    return
  }
  func.func @transform_0(%arg0: i32) -> (i32, i32, i32) {
    %c0_i32 = arith.constant 0 : i32
    %c0_i32_0 = arith.constant 0 : i32
    %c0_i32_1 = arith.constant 0 : i32
    return %c0_i32, %arg0, %c0_i32_0 : i32, i32, i32
  }
  func.func @transform_1(%arg0: i32) -> (i32, i32, i32) {
    %c0_i32 = arith.constant 0 : i32
    %c0_i32_0 = arith.constant 0 : i32
    %c0_i32_1 = arith.constant 0 : i32
    return %c0_i32, %arg0, %c0_i32_0 : i32, i32, i32
  }
  func.func @transform_2(%arg0: i32) -> (i32, i32) {
    %c0_i32 = arith.constant 0 : i32
    %c0_i32_0 = arith.constant 0 : i32
    %c0_i32_1 = arith.constant 0 : i32
    return %c0_i32, %c0_i32_0 : i32, i32
  }
  func.func @transform_3(%arg0: i32) -> (i32, i32) {
    %c0_i32 = arith.constant 0 : i32
    %c0_i32_0 = arith.constant 0 : i32
    %c0_i32_1 = arith.constant 0 : i32
    return %c0_i32, %c0_i32_0 : i32, i32
  }
  func.func @transform_4(%arg0: i32) -> (i32, i32, i32) {
    %c0_i32 = arith.constant 0 : i32
    %c0_i32_0 = arith.constant 0 : i32
    %c0_i32_1 = arith.constant 0 : i32
    return %c0_i32, %arg0, %c0_i32_0 : i32, i32, i32
  }
  func.func @transform_5(%arg0: i32) -> (i32, i32, i32) {
    %c0_i32 = arith.constant 0 : i32
    %c0_i32_0 = arith.constant 0 : i32
    %c0_i32_1 = arith.constant 0 : i32
    return %c0_i32, %arg0, %c0_i32_0 : i32, i32, i32
  }
}

</mosaic_0001>

<llo_original>
// kernel: tpu_custom_call.1
$region0: #{tpu_custom_call.1}
  #allocation0 [shape = 'u32[]', space=smem, size = 0x4, offset = 0x4, fixed_abs, tag = 'smem constant byte address 0x4 - core index']
  #allocation1 [shape = 'u32[144,128]{1,0:T(1,128)}', space=vmem, size = 0x12000, scoped, tag = 'internal scratch']
  #allocation2 [shape = 'f32[2,32]{1,0:T(2,128)}', space=vmem, size = 0x400, scoped, tag = 'scratch operand']
  #allocation3 [shape = 'f32[2,32]{1,0:T(2,128)}', space=vmem, size = 0x400, scoped, tag = 'scratch operand']
  #allocation4 [shape = 'f32[2,32]{1,0:T(2,128)}', space=vmem, size = 0x400, scoped, tag = 'scratch operand']
  #allocation5 [shape = 'f32[2,32]{1,0:T(2,128)}', space=vmem, size = 0x400, scoped, tag = 'scratch operand']
  %s0 = inlined_call_operand.hbm [shape: f32[8,2,128], index: 0, kind: input, shape index: {}]
  %s1 = inlined_call_operand.hbm [shape: f32[8,2,128], index: 1, kind: input, shape index: {}]
  %s2 = inlined_call_operand.hbm [shape: f32[32,128], index: 2, kind: input, shape index: {}]
  %s3 = inlined_call_operand.hbm [shape: f32[32,128], index: 3, kind: input, shape index: {}]
  %s4 = inlined_call_operand.hbm [shape: f32[8,2,32], index: 4, kind: output, shape index: {0}]
  %s5 = inlined_call_operand.hbm [shape: f32[8,2,32], index: 5, kind: output, shape index: {1}]
  %6 = xla_tuple %s4, %s5
  %s7 = sld [smem:[#allocation0]]
  $region57: #{tpu_custom_call.1} parent=0
    _
  %s9 = ssub.s32 1, %s7
  %s10 = scalar_select 0, %s9, %s7
  $region1: #{tpu_custom_call.1} parent=0
    #allocation6 [shape = 'u8[8192]{0}', space=vmem, size = 0x2000, scoped, tag = 'input window, operand 0, single buffered']
    #allocation7 [shape = 's32[1]{0}', space=sflag, size = 0x4, scoped, tag = 'scoped memory for tpu_custom_call.1']
    #allocation8 [shape = 's32[1]{0}', space=sflag, size = 0x4, scoped, tag = 'scoped memory for tpu_custom_call.1']
    #allocation9 [shape = 'u8[8192]{0}', space=vmem, size = 0x2000, scoped, tag = 'input window, operand 1, single buffered']
    #allocation10 [shape = 's32[1]{0}', space=sflag, size = 0x4, scoped, tag = 'scoped memory for tpu_custom_call.1']
    #allocation11 [shape = 'u8[16384]{0}', space=vmem, size = 0x4000, scoped, tag = 'input window, operand 2, single buffered']
    #allocation12 [shape = 'u8[16384]{0}', space=vmem, size = 0x4000, scoped, tag = 'input window, operand 3, single buffered']
    #allocation13 [shape = 's32[1]{0}', space=sflag, size = 0x4, scoped, tag = 'scoped memory for tpu_custom_call.1']
    #allocation14 [shape = 'u8[8192]{0}', space=vmem, size = 0x2000, scoped, tag = 'output window, operand 0, single buffered']
    #allocation15 [shape = 'u8[8192]{0}', space=vmem, size = 0x2000, scoped, tag = 'output window, operand 1, single buffered']
    #allocation16 [shape = 's32[1]{0}', space=sflag, size = 0x4, scoped, tag = 'scoped memory for tpu_custom_call.1']
    %11 = vsyncpa [#allocation7], 0
    %12 = vsyncpa [#allocation10], 0
    %13 = vsyncpa [#allocation13], 0
    %14 = vsyncpa [#allocation8], 0
    %15 = vsyncpa [#allocation16], 0
    // Predicated region
    $region2: #{tpu_custom_call.1} parent=1 // pred_check
      _
    $region3: #{tpu_custom_call.1} parent=1 // pred_check_branch
      %17 = sbr.rel (0) target = $region5
    $region4: #{tpu_custom_call.1} parent=1 // pred_region
      %s19 = ssub.s32 256, 256
      %20 = vsyncadd [#allocation7], %s19
      %s21 = sshll.u32 [#allocation6], 4
      %s22 = int_to_ptr.vmem [resolvable:$true] %s21
      %27 = dma.hbm_to_vmem [thread:$0]  %s0, 256, %s22, [#allocation7], 32, 32, 2
    $region5: #{tpu_custom_call.1} parent=1 // pred_fallthru
      _
    // Predicated region
    $region6: #{tpu_custom_call.1} parent=1 // pred_check
      _
    $region7: #{tpu_custom_call.1} parent=1 // pred_check_branch
      %29 = sbr.rel (0) target = $region9
    $region8: #{tpu_custom_call.1} parent=1 // pred_region
      %s31 = ssub.s32 256, 256
      %32 = vsyncadd [#allocation10], %s31
      %s33 = sshll.u32 [#allocation9], 4
      %s34 = int_to_ptr.vmem [resolvable:$true] %s33
      %39 = dma.hbm_to_vmem [thread:$0]  %s1, 256, %s34, [#allocation10], 32, 32, 2
    $region9: #{tpu_custom_call.1} parent=1 // pred_fallthru
      _
    // Predicated region
    $region10: #{tpu_custom_call.1} parent=1 // pred_check
      _
    $region11: #{tpu_custom_call.1} parent=1 // pred_check_branch
      %41 = sbr.rel (0) target = $region13
    $region12: #{tpu_custom_call.1} parent=1 // pred_region
      %s43 = ssub.s32 512, 512
      %44 = vsyncadd [#allocation10], %s43
      %s45 = sshll.u32 [#allocation11], 4
      %s46 = int_to_ptr.vmem [resolvable:$true] %s45
      %51 = dma.hbm_to_vmem [thread:$0]  %s2, 512, %s46, [#allocation10], 128, 128, 8
    $region13: #{tpu_custom_call.1} parent=1 // pred_fallthru
      _
    // Predicated region
    $region14: #{tpu_custom_call.1} parent=1 // pred_check
      _
    $region15: #{tpu_custom_call.1} parent=1 // pred_check_branch
      %53 = sbr.rel (0) target = $region17
    $region16: #{tpu_custom_call.1} parent=1 // pred_region
      %s55 = ssub.s32 512, 512
      %56 = vsyncadd [#allocation13], %s55
      %s57 = sshll.u32 [#allocation12], 4
      %s58 = int_to_ptr.vmem [resolvable:$true] %s57
      %63 = dma.hbm_to_vmem [thread:$0]  %s3, 512, %s58, [#allocation13], 128, 128, 8
    $region17: #{tpu_custom_call.1} parent=1 // pred_fallthru
      _
    // Predicated region
    $region18: #{tpu_custom_call.1} parent=1 // pred_check
      _
    $region19: #{tpu_custom_call.1} parent=1 // pred_check_branch
      %65 = sbr.rel (0) target = $region21
    $region20: #{tpu_custom_call.1} parent=1 // pred_region
      %66 = dma.done [#allocation7], 256
    $region21: #{tpu_custom_call.1} parent=1 // pred_fallthru
      _
    // Predicated region
    $region22: #{tpu_custom_call.1} parent=1 // pred_check
      _
    $region23: #{tpu_custom_call.1} parent=1 // pred_check_branch
      %68 = sbr.rel (0) target = $region25
    $region24: #{tpu_custom_call.1} parent=1 // pred_region
      %69 = dma.done [#allocation10], 256
    $region25: #{tpu_custom_call.1} parent=1 // pred_fallthru
      _
    // Predicated region
    $region26: #{tpu_custom_call.1} parent=1 // pred_check
      _
    $region27: #{tpu_custom_call.1} parent=1 // pred_check_branch
      %71 = sbr.rel (0) target = $region29
    $region28: #{tpu_custom_call.1} parent=1 // pred_region
      %72 = dma.done [#allocation10], 512
    $region29: #{tpu_custom_call.1} parent=1 // pred_fallthru
      _
    // Predicated region
    $region30: #{tpu_custom_call.1} parent=1 // pred_check
      _
    $region31: #{tpu_custom_call.1} parent=1 // pred_check_branch
      %74 = sbr.rel (0) target = $region33
    $region32: #{tpu_custom_call.1} parent=1 // pred_region
      %75 = dma.done [#allocation13], 512
    $region33: #{tpu_custom_call.1} parent=1 // pred_fallthru
      _
    %vm76 = vcmask 254976
    %77 = vst.msk [vmem:[#allocation2] sm:$0x3] %vm76, 0.0
    %78 = vst.msk [vmem:[#allocation3] sm:$0x3] %vm76, 0.0
    %79 = vst.msk [vmem:[#allocation4] sm:$0x3] %vm76, 0.0
    %80 = vst.msk [vmem:[#allocation5] sm:$0x3] %vm76, 0.0
    %v81 = vld [vmem:[#allocation11] sm:$0xff]
    %v82 = vld [vmem:[#allocation11 + $0x8] sm:$0xff]
    %v83 = vld [vmem:[#allocation11 + $0x10] sm:$0xff]
    %v84 = vld [vmem:[#allocation11 + $0x18] sm:$0xff]
    %v85 = vld [vmem:[#allocation12] sm:$0xff]
    %v86 = vld [vmem:[#allocation12 + $0x8] sm:$0xff]
    %v87 = vld [vmem:[#allocation12 + $0x10] sm:$0xff]
    %v88 = vld [vmem:[#allocation12 + $0x18] sm:$0xff]
    loop: start=0, step=1, limit=8
    $region34: #{tpu_custom_call.1} parent=1 // loop_pre_header
      _
    $region35: #{tpu_custom_call.1} parent=1 // loop_header
      %s90 = sphi 0, %s94
      %p91 = scmp.ge.s32.totalorder %s90, 8
    $region36: #{tpu_custom_call.1} parent=1 // loop_header_branch
      %93 = sbr.rel (%p91) target = $region40
    $region37: #{tpu_custom_call.1} parent=1 // loop_body
      %s95 = smul.u32 %s90, 2
      %s96 = scalar_lea.vmem [#allocation6], %s95
      %v97 = vld [vmem:[%s96] sm:$0x3]
      %v98 = vld [vmem:[#allocation2] sm:$0x3]
      %vm99 = vcmask 261120
      %v101 = vsel %vm99, %v98, 0
      %103 = vmatprep.subr.mxu0 0.0
      %104 = vmatpush1.msra.mxu0 %v81
      %105 = vmatprep.subr.mxu0 0.0
      %106 = vmatpush1.msra.mxu0 %v82
      %107 = vmatprep.subr.mxu0 0.0
      %108 = vmatpush1.msra.mxu0 %v83
      %109 = vmatprep.subr.mxu0 0.0
      %110 = vmatpush1.msra.mxu0 %v84
      %111 = vmatprep.subr.mxu0 0.0
      %112 = vmatpush1.msra.mxu0 0.0
      %113 = vmatprep.subr.mxu0 0.0
      %114 = vmatpush1.msra.mxu0 0.0
      %115 = vmatprep.subr.mxu0 0.0
      %116 = vmatpush1.msra.mxu0 0.0
      %117 = vmatprep.subr.mxu0 0.0
      %118 = vmatpush1.msra.mxu0 0.0
      %119 = vmatprep.subr.mxu0 0.0
      %120 = vmatpush1.msra.mxu0 0.0
      %121 = vmatprep.subr.mxu0 0.0
      %122 = vmatpush1.msra.mxu0 0.0
      %123 = vmatprep.subr.mxu0 0.0
      %124 = vmatpush1.msra.mxu0 0.0
      %125 = vmatprep.subr.mxu0 0.0
      %126 = vmatpush1.msra.mxu0 0.0
      %127 = vmatprep.subr.mxu0 0.0
      %128 = vmatpush1.msra.mxu0 0.0
      %129 = vmatprep.subr.mxu0 0.0
      %130 = vmatpush1.msra.mxu0 0.0
      %131 = vmatprep.subr.mxu0 0.0
      %132 = vmatpush1.msra.mxu0 0.0
      %133 = vmatprep.subr.mxu0 0.0
      %134 = vmatpush1.msra.mxu0 0.0
      %135 = vmatprep.subr.mxu0 0.0
      %136 = vmatpush1.msra.mxu0 0.0
      %137 = vmatprep.subr.mxu0 0.0
      %138 = vmatpush1.msra.mxu0 0.0
      %139 = vmatprep.subr.mxu0 0.0
      %140 = vmatpush1.msra.mxu0 0.0
      %141 = vmatprep.subr.mxu0 0.0
      %142 = vmatpush1.msra.mxu0 0.0
      %143 = vmatprep.subr.mxu0 0.0
      %144 = vmatpush1.msra.mxu0 0.0
      %145 = vmatprep.subr.mxu0 0.0
      %146 = vmatpush1.msra.mxu0 0.0
      %147 = vmatprep.subr.mxu0 0.0
      %148 = vmatpush1.msra.mxu0 0.0
      %149 = vmatprep.subr.mxu0 0.0
      %150 = vmatpush1.msra.mxu0 0.0
      %151 = vmatprep.subr.mxu0 0.0
      %152 = vmatpush1.msra.mxu0 0.0
      %153 = vmatprep.subr.mxu0 0.0
      %154 = vmatpush1.msra.mxu0 0.0
      %155 = vmatprep.subr.mxu0 0.0
      %156 = vmatpush1.msra.mxu0 0.0
      %157 = vmatprep.subr.mxu0 0.0
      %158 = vmatpush1.msra.mxu0 0.0
      %159 = vmatprep.subr.mxu0 0.0
      %160 = vmatpush1.msra.mxu0 0.0
      %161 = vmatprep.subr.mxu0 0.0
      %162 = vmatpush1.msra.mxu0 0.0
      %163 = vmatprep.subr.mxu0 0.0
      %164 = vmatpush1.msra.mxu0 0.0
      %165 = vmatprep.subr.mxu0 0.0
      %166 = vmatpush1.msra.mxu0 0.0
      %167 = vmatprep.mubr.f32.mxu0 0.0
      %168 = vmatmul.mubr.f32.gmra.mrb[0].mxu0 %v101
      %v169 = vpop.f32.mrb[0].mxu0
      %v170 = vadd.f32 0.0, %v169
      %v171 = vpop.f32.mrb[0].mxu0
      %172 = vdwg.mxu0
      %v173 = vadd.f32 %v97, %v170
      %v174 = vxor.u32 %v173, 2147483648
      %v175 = vmul.f32 %v174, 1.442695
      %v176 = vpow.pop %v175
      %v177 = vadd.f32 %v176, 1.0
      %v178 = vrcp.pop %v177
      %v179 = vmul.f32 1.0, %v178
      %v180 = vtanh.pop %v173
      %v181 = vld [vmem:[#allocation3] sm:$0x3]
      %183 = vrot.lane.b32.xlu0 %v181, 32
      %v184 = vpop.permute.xlu0 %183
      %v186 = vmul.f32 %v179, %v184
      %188 = vrot.lane.b32.xlu0 %v180, 64
      %v189 = vpop.permute.xlu0 %188
      %v191 = vmul.f32 %v179, %v189
      %193 = vrot.lane.b32.xlu0 %v191, 32
      %v194 = vpop.permute.xlu0 %193
      %v196 = vadd.f32 %v186, %v194
      %v197 = vtanh.pop %v196
      %199 = vrot.lane.b32.xlu0 %v197, 64
      %v200 = vpop.permute.xlu0 %199
      %v202 = vmul.f32 %v179, %v200
      %204 = vrot.lane.b32.xlu0 %v196, 96
      %v205 = vpop.permute.xlu0 %204
      %207 = vst.msk [vmem:[#allocation3] sm:$0x3] %vm76, %v205
      %209 = vrot.lane.b32.xlu0 %v202, 32
      %v210 = vpop.permute.xlu0 %209
      %212 = vst.msk [vmem:[#allocation2] sm:$0x3] %vm76, %v210
      %s213 = scalar_lea.vmem [#allocation14], %s95
      %214 = vst.msk [vmem:[%s213] sm:$0x3] %vm76, %v210
      %s215 = ssub.s32 7, %s90
      %s216 = smul.u32 %s215, 2
      %s217 = scalar_lea.vmem [#allocation9], %s216
      %v218 = vld [vmem:[%s217] sm:$0x3]
      %v219 = vld [vmem:[#allocation4] sm:$0x3]
      %v221 = vsel %vm99, %v219, 0
      %223 = vmatprep.subr.mxu0 0.0
      %224 = vmatpush1.msra.mxu0 %v85
      %225 = vmatprep.subr.mxu0 0.0
      %226 = vmatpush1.msra.mxu0 %v86
      %227 = vmatprep.subr.mxu0 0.0
      %228 = vmatpush1.msra.mxu0 %v87
      %229 = vmatprep.subr.mxu0 0.0
      %230 = vmatpush1.msra.mxu0 %v88
      %231 = vmatprep.subr.mxu0 0.0
      %232 = vmatpush1.msra.mxu0 0.0
      %233 = vmatprep.subr.mxu0 0.0
      %234 = vmatpush1.msra.mxu0 0.0
      %235 = vmatprep.subr.mxu0 0.0
      %236 = vmatpush1.msra.mxu0 0.0
      %237 = vmatprep.subr.mxu0 0.0
      %238 = vmatpush1.msra.mxu0 0.0
      %239 = vmatprep.subr.mxu0 0.0
      %240 = vmatpush1.msra.mxu0 0.0
      %241 = vmatprep.subr.mxu0 0.0
      %242 = vmatpush1.msra.mxu0 0.0
      %243 = vmatprep.subr.mxu0 0.0
      %244 = vmatpush1.msra.mxu0 0.0
      %245 = vmatprep.subr.mxu0 0.0
      %246 = vmatpush1.msra.mxu0 0.0
      %247 = vmatprep.subr.mxu0 0.0
      %248 = vmatpush1.msra.mxu0 0.0
      %249 = vmatprep.subr.mxu0 0.0
      %250 = vmatpush1.msra.mxu0 0.0
      %251 = vmatprep.subr.mxu0 0.0
      %252 = vmatpush1.msra.mxu0 0.0
      %253 = vmatprep.subr.mxu0 0.0
      %254 = vmatpush1.msra.mxu0 0.0
      %255 = vmatprep.subr.mxu0 0.0
      %256 = vmatpush1.msra.mxu0 0.0
      %257 = vmatprep.subr.mxu0 0.0
      %258 = vmatpush1.msra.mxu0 0.0
      %259 = vmatprep.subr.mxu0 0.0
      %260 = vmatpush1.msra.mxu0 0.0
      %261 = vmatprep.subr.mxu0 0.0
      %262 = vmatpush1.msra.mxu0 0.0
      %263 = vmatprep.subr.mxu0 0.0
      %264 = vmatpush1.msra.mxu0 0.0
      %265 = vmatprep.subr.mxu0 0.0
      %266 = vmatpush1.msra.mxu0 0.0
      %267 = vmatprep.subr.mxu0 0.0
      %268 = vmatpush1.msra.mxu0 0.0
      %269 = vmatprep.subr.mxu0 0.0
      %270 = vmatpush1.msra.mxu0 0.0
      %271 = vmatprep.subr.mxu0 0.0
      %272 = vmatpush1.msra.mxu0 0.0
      %273 = vmatprep.subr.mxu0 0.0
      %274 = vmatpush1.msra.mxu0 0.0
      %275 = vmatprep.subr.mxu0 0.0
      %276 = vmatpush1.msra.mxu0 0.0
      %277 = vmatprep.subr.mxu0 0.0
      %278 = vmatpush1.msra.mxu0 0.0
      %279 = vmatprep.subr.mxu0 0.0
      %280 = vmatpush1.msra.mxu0 0.0
      %281 = vmatprep.subr.mxu0 0.0
      %282 = vmatpush1.msra.mxu0 0.0
      %283 = vmatprep.subr.mxu0 0.0
      %284 = vmatpush1.msra.mxu0 0.0
      %285 = vmatprep.subr.mxu0 0.0
      %286 = vmatpush1.msra.mxu0 0.0
      %287 = vmatprep.mubr.f32.mxu0 0.0
      %288 = vmatmul.mubr.f32.gmra.mrb[0].mxu0 %v221
      %v289 = vpop.f32.mrb[0].mxu0
      %v290 = vadd.f32 0.0, %v289
      %v291 = vpop.f32.mrb[0].mxu0
      %292 = vdwg.mxu0
      %v293 = vadd.f32 %v218, %v290
      %v294 = vxor.u32 %v293, 2147483648
      %v295 = vmul.f32 %v294, 1.442695
      %v296 = vpow.pop %v295
      %v297 = vadd.f32 %v296, 1.0
      %v298 = vrcp.pop %v297
      %v299 = vmul.f32 1.0, %v298
      %v300 = vtanh.pop %v293
      %v301 = vld [vmem:[#allocation5] sm:$0x3]
      %303 = vrot.lane.b32.xlu0 %v301, 32
      %v304 = vpop.permute.xlu0 %303
      %v306 = vmul.f32 %v299, %v304
      %308 = vrot.lane.b32.xlu0 %v300, 64
      %v309 = vpop.permute.xlu0 %308
      %v311 = vmul.f32 %v299, %v309
      %313 = vrot.lane.b32.xlu0 %v311, 32
      %v314 = vpop.permute.xlu0 %313
      %v316 = vadd.f32 %v306, %v314
      %v317 = vtanh.pop %v316
      %319 = vrot.lane.b32.xlu0 %v317, 64
      %v320 = vpop.permute.xlu0 %319
      %v322 = vmul.f32 %v299, %v320
      %324 = vrot.lane.b32.xlu0 %v316, 96
      %v325 = vpop.permute.xlu0 %324
      %327 = vst.msk [vmem:[#allocation5] sm:$0x3] %vm76, %v325
      %329 = vrot.lane.b32.xlu0 %v322, 32
      %v330 = vpop.permute.xlu0 %329
      %332 = vst.msk [vmem:[#allocation4] sm:$0x3] %vm76, %v330
      %s333 = scalar_lea.vmem [#allocation15], %s216
      %334 = vst.msk [vmem:[%s333] sm:$0x3] %vm76, %v330
    $region38: #{tpu_custom_call.1} parent=1 // loop_footer
      %s94 = sadd.s32 1, %s90
    $region39: #{tpu_custom_call.1} parent=1 // loop_footer_branch
      %89 = sbr.rel target = $region35
    $region40: #{tpu_custom_call.1} parent=1 // loop_exit
      _
    // Predicated region
    $region41: #{tpu_custom_call.1} parent=1 // pred_check
      _
    $region42: #{tpu_custom_call.1} parent=1 // pred_check_branch
      %336 = sbr.rel (0) target = $region44
    $region43: #{tpu_custom_call.1} parent=1 // pred_region
      %s338 = ssub.s32 256, 256
      %339 = vsyncadd [#allocation8], %s338
      %s340 = sshll.u32 [#allocation14], 4
      %s341 = int_to_ptr.vmem [resolvable:$true] %s340
      %346 = dma.vmem_to_hbm [thread:$0]  %s341, 256, %s4, [#allocation8], 32, 32, 2
    $region44: #{tpu_custom_call.1} parent=1 // pred_fallthru
      _
    // Predicated region
    $region45: #{tpu_custom_call.1} parent=1 // pred_check
      _
    $region46: #{tpu_custom_call.1} parent=1 // pred_check_branch
      %348 = sbr.rel (0) target = $region48
    $region47: #{tpu_custom_call.1} parent=1 // pred_region
      %s350 = ssub.s32 256, 256
      %351 = vsyncadd [#allocation16], %s350
      %s352 = sshll.u32 [#allocation15], 4
      %s353 = int_to_ptr.vmem [resolvable:$true] %s352
      %358 = dma.vmem_to_hbm [thread:$0]  %s353, 256, %s5, [#allocation16], 32, 32, 2
    $region48: #{tpu_custom_call.1} parent=1 // pred_fallthru
      _
    // Predicated region
    $region49: #{tpu_custom_call.1} parent=1 // pred_check
      _
    $region50: #{tpu_custom_call.1} parent=1 // pred_check_branch
      %360 = sbr.rel (0) target = $region52
    $region51: #{tpu_custom_call.1} parent=1 // pred_region
      %361 = dma.done [#allocation8], 256
    $region52: #{tpu_custom_call.1} parent=1 // pred_fallthru
      _
    // Predicated region
    $region53: #{tpu_custom_call.1} parent=1 // pred_check
      _
    $region54: #{tpu_custom_call.1} parent=1 // pred_check_branch
      %363 = sbr.rel (0) target = $region56
    $region55: #{tpu_custom_call.1} parent=1 // pred_region
      %364 = dma.done [#allocation16], 256
    $region56: #{tpu_custom_call.1} parent=1 // pred_fallthru
      _
    %365 = vsyncpa [#allocation7], 1
    %366 = vsyncpa [#allocation10], 1
    %367 = vsyncpa [#allocation13], 1
    %368 = vsyncpa [#allocation8], 1
    %369 = vsyncpa [#allocation16], 1

</llo_original>
